<compile_context>
chip_gen: v7x
topology: tpu7x:2x2x1
jax: 0.10.0
libtpu: 0.0.40
codegen_flags: <defaults>
</compile_context>

<pallas_src>
import functools
import math

import jax
import jax.numpy as jnp
from jax.experimental import pallas as pl
from jax.experimental.pallas import tpu as pltpu

LN_EPS = 1e-5                      # PyTorch nn.LayerNorm default
INV_SQRT2 = 1.0 / math.sqrt(2.0)
LANE = 128


def _round_up(x, m):
    return ((x + m - 1) // m) * m


def _pick_vmem_limit():
    """~3/4 of physical VMEM: ~96 MiB on v5e/v6e (128 MiB), ~48 MiB on v7x."""
    cap = 64 * 1024 * 1024
    try:
        cap = int(pltpu.get_tpu_info().vmem_capacity_bytes)
    except Exception:
        pass
    return int(cap * 3 // 4)


def _gelu_exact(x):
    # matches torch: x * 0.5 * (1 + erf(x / sqrt(2)))
    return x * 0.5 * (1.0 + jax.lax.erf(x * INV_SQRT2))


def _ffn_body(x_bf16, w1_bf16, w2_bf16, vec_f32, inv_h):
    """fc2(LN(gelu(fc1(x)))) on lane-padded data.

    vec_f32 rows: [b1, gamma, beta, b2, lane_mask, 0, 0, 0], each (Hp,).
    Padded hidden lanes of x / weights / b1 are zero, so pre-LN activations
    are zero there; the two-pass variance uses the lane mask and divides by
    the real hidden width, and gamma/beta are zero on padded lanes, so the
    padding is numerically exact. Matmuls run bf16 with f32 accumulation.
    """
    b1 = vec_f32[0:1]
    gamma = vec_f32[1:2]
    beta = vec_f32[2:3]
    b2 = vec_f32[3:4]
    mask = vec_f32[4:5]

    h = jnp.dot(x_bf16, w1_bf16, preferred_element_type=jnp.float32) + b1
    h = _gelu_exact(h)
    mean = jnp.sum(h, axis=-1, keepdims=True) * inv_h
    centered = (h - mean) * mask                       # zero out padded lanes
    var = jnp.sum(centered * centered, axis=-1, keepdims=True) * inv_h
    h = centered * jax.lax.rsqrt(var + LN_EPS) * gamma + beta
    return jnp.dot(h.astype(jnp.bfloat16), w2_bf16,
                   preferred_element_type=jnp.float32) + b2


def ffn1_kernel(x_ref, w1_ref, w2_ref, vec_ref, o_ref, *, inv_h):
    """FFN1 on a [tile_rows, Hp] slab of the flattened (B*Np) node features."""
    o_ref[...] = _ffn_body(x_ref[...], w1_ref[...], w2_ref[...],
                           vec_ref[...], inv_h).astype(o_ref.dtype)


def gconv_ffn2_kernel(g_ref, y1_ref, w1_ref, w2_ref, vec_ref, o_ref, *, inv_h):
    """(graph-tile @ y1) followed by the output FFN, per (batch, M-tile)."""
    gi = jnp.dot(g_ref[0], y1_ref[0],                   # bf16 x bf16 -> f32
                 preferred_element_type=jnp.float32)    # [tile_m, Hp]
    out = _ffn_body(gi.astype(jnp.bfloat16), w1_ref[...], w2_ref[...],
                    vec_ref[...], inv_h)
    o_ref[0] = out.astype(o_ref.dtype)


def gnn_forward(x, graph, params):
    """x: [B, N, H] f32, graph: [B, M, N] f32, params: dict of f32 weights."""
    B, N, H = x.shape
    M = graph.shape[1]

    Hp = _round_up(H, LANE)          # lane-dense hidden width
    Np = _round_up(N, LANE)          # lane-dense node count (K dim of gconv)
    rows = B * Np                    # multiple of 128 by construction

    # FFN1 row tile: largest of (512, 256, 128) dividing rows exactly so the
    # y1 handoff reshape is free; halve if that collapses the grid to 1 step
    # (keeps both v7x TensorCores fed).
    tile_rows = 512 if rows % 512 == 0 else (256 if rows % 256 == 0 else 128)
    if rows // tile_rows == 1 and tile_rows > 128:
        tile_rows //= 2

    # gconv M tile: feed the 256x256 MXU, but keep >= 2 parallel steps if B==1.
    if M >= 256:
        tile_m = 256
        if B == 1 and _round_up(M, 256) // 256 < 2:
            tile_m = 128
    elif M >= 128:
        tile_m = 128
    else:
        tile_m = _round_up(M, 16)    # bf16-friendly sublane multiple
    Mp = _round_up(M, tile_m)

    vmem_limit = _pick_vmem_limit()
    inv_h = 1.0 / float(H)

    # ---- parameters: weights padded + cast to bf16 once; per-FFN vectors
    #      (b1, gamma, beta, b2) + lane mask packed into one (8, Hp) slab ----
    def pad_w(w):
        return jnp.pad(w, ((0, Hp - H), (0, Hp - H))).astype(jnp.bfloat16)

    lane_mask = (jnp.arange(Hp) < H).astype(jnp.float32)

    def pack_vec(*vs):
        rows_ = [jnp.pad(v.reshape(-1).astype(jnp.float32), (0, Hp - H))
                 for v in vs]
        rows_.append(lane_mask)
        while len(rows_) < 8:
            rows_.append(jnp.zeros((Hp,), jnp.float32))
        return jnp.stack(rows_)      # (8, Hp)

    w11, w12 = pad_w(params["w11"]), pad_w(params["w12"])
    w21, w22 = pad_w(params["w21"]), pad_w(params["w22"])
    vec1 = pack_vec(params["b11"], params["gamma1"], params["beta1"],
                    params["b12"])
    vec2 = pack_vec(params["b21"], params["gamma2"], params["beta2"],
                    params["b22"])

    # ---- activations: pad once, cast MXU operands to bf16 in the wrapper ----
    x_flat = jnp.pad(x, ((0, 0), (0, Np - N), (0, Hp - H))
                     ).astype(jnp.bfloat16).reshape(rows, Hp)
    gp = jnp.pad(graph, ((0, 0), (0, Mp - M), (0, Np - N))).astype(jnp.bfloat16)

    # ---- kernel 1: FFN1 over all flattened node rows (bf16 output) ----
    y1_flat = pl.pallas_call(
        functools.partial(ffn1_kernel, inv_h=inv_h),
        out_shape=jax.ShapeDtypeStruct((rows, Hp), jnp.bfloat16),
        grid_spec=pltpu.PrefetchScalarGridSpec(
            num_scalar_prefetch=0,
            grid=(rows // tile_rows,),
            in_specs=[
                pl.BlockSpec((tile_rows, Hp), lambda i: (i, 0)),  # x rows
                pl.BlockSpec((Hp, Hp), lambda i: (0, 0)),         # w11
                pl.BlockSpec((Hp, Hp), lambda i: (0, 0)),         # w12
                pl.BlockSpec((8, Hp), lambda i: (0, 0)),          # packed vecs
            ],
            out_specs=pl.BlockSpec((tile_rows, Hp), lambda i: (i, 0)),
        ),
        compiler_params=pltpu.CompilerParams(
            dimension_semantics=("parallel",),
            vmem_limit_bytes=vmem_limit),
    )(x_flat, w11, w12, vec1)

    # rows == B * Np exactly -> pure (free) reshape, no slice/copy.
    y1 = y1_flat.reshape(B, Np, Hp)

    # ---- kernel 2: gconv + FFN2, tiled over (batch, M-tiles) ----
    out_p = pl.pallas_call(
        functools.partial(gconv_ffn2_kernel, inv_h=inv_h),
        out_shape=jax.ShapeDtypeStruct((B, Mp, Hp), jnp.float32),
        grid_spec=pltpu.PrefetchScalarGridSpec(
            num_scalar_prefetch=0,
            grid=(B, Mp // tile_m),
            in_specs=[
                pl.BlockSpec((1, tile_m, Np), lambda b, m: (b, m, 0)),  # graph
                pl.BlockSpec((1, Np, Hp), lambda b, m: (b, 0, 0)),      # y1
                pl.BlockSpec((Hp, Hp), lambda b, m: (0, 0)),            # w21
                pl.BlockSpec((Hp, Hp), lambda b, m: (0, 0)),            # w22
                pl.BlockSpec((8, Hp), lambda b, m: (0, 0)),             # vecs
            ],
            out_specs=pl.BlockSpec((1, tile_m, Hp), lambda b, m: (b, m, 0)),
        ),
        compiler_params=pltpu.CompilerParams(
            dimension_semantics=("parallel", "parallel"),
            vmem_limit_bytes=vmem_limit),
    )(gp, y1, w21, w22, vec2)

    return out_p[:, :M, :H]


def gnn_reference(x, graph, params):
    """Pure-JAX f32 reference mirroring the PyTorch forward exactly."""
    def ffn(inp, w1, b1, gamma, beta, w2, b2):
        h = inp @ w1 + b1
        h = _gelu_exact(h)
        mean = jnp.mean(h, axis=-1, keepdims=True)
        var = jnp.mean((h - mean) ** 2, axis=-1, keepdims=True)
        h = (h - mean) / jnp.sqrt(var + LN_EPS) * gamma + beta
        return h @ w2 + b2

    y1 = ffn(x, params["w11"], params["b11"], params["gamma1"],
             params["beta1"], params["w12"], params["b12"])
    gi = jnp.einsum("bmn,bnh->bmh", graph, y1)
    return ffn(gi, params["w21"], params["b21"], params["gamma2"],
               params["beta2"], params["w22"], params["b22"])


def make_params(key, h):
    ks = jax.random.split(key, 8)
    s = 0.02
    return {
        "w11": s * jax.random.normal(ks[0], (h, h), jnp.float32),
        "b11": s * jax.random.normal(ks[1], (h,), jnp.float32),
        "gamma1": jnp.ones((h,), jnp.float32),
        "beta1": jnp.zeros((h,), jnp.float32),
        "w12": s * jax.random.normal(ks[2], (h, h), jnp.float32),
        "b12": s * jax.random.normal(ks[3], (h,), jnp.float32),
        "w21": s * jax.random.normal(ks[4], (h, h), jnp.float32),
        "b21": s * jax.random.normal(ks[5], (h,), jnp.float32),
        "gamma2": jnp.ones((h,), jnp.float32),
        "beta2": jnp.zeros((h,), jnp.float32),
        "w22": s * jax.random.normal(ks[6], (h, h), jnp.float32),
        "b22": s * jax.random.normal(ks[7], (h,), jnp.float32),
    }


if __name__ == "__main__":
    B, N, M, H = 2, 8, 8, 32   # bsz, num nodes, graph rows (max_num), hidden
    # n_head = 4: with a head-shared adjacency the per-head bmm + concat is
    # exactly one full-width matmul, which is what the gconv kernel computes.

    key = jax.random.PRNGKey(0)
    kx, kg, kp = jax.random.split(key, 3)

    x = jax.random.normal(kx, (B, N, H), jnp.float32)        # encoder_outputs
    graph = jax.random.uniform(kg, (B, M, N), jnp.float32)   # num_graph
    params = make_params(kp, H)

    out = gnn_forward(x, graph, params)
    out = jax.block_until_ready(out)

    ref = gnn_reference(x, graph, params)
    assert out.shape == (B, M, H)
    # bf16 matmul operands (f32 accumulation) -> compare at bf16-level tol.
    assert jnp.allclose(out, ref, atol=5e-2, rtol=5e-2), "mismatch vs reference"

    print("KERNEL_OK")
</pallas_src>

<mosaic_0001>
module attributes {stable_mosaic.version = 11 : i64} {
  func.func @ffn1_kernel(%arg0: i32, %arg1: memref<128x128xbf16, #tpu.memory_space<vmem>>, %arg2: memref<128x128xbf16, #tpu.memory_space<vmem>>, %arg3: memref<128x128xbf16, #tpu.memory_space<vmem>>, %arg4: memref<8x128xf32, #tpu.memory_space<vmem>>, %arg5: memref<128x128xbf16, #tpu.memory_space<vmem>>) attributes {dimension_semantics = [#tpu.dimension_semantics<parallel>], iteration_bounds = array<i64: 2>, scalar_prefetch = 0 : i64, scratch_operands = 0 : i64, tpu.core_type = #tpu.core_type<tc>, window_params = [{transform_indices = @transform_0, window_bounds = array<i64: 128, 128>}, {pipeline_mode = #tpu.pipeline_mode<synchronous>, transform_indices = @transform_1, window_bounds = array<i64: 128, 128>}, {pipeline_mode = #tpu.pipeline_mode<synchronous>, transform_indices = @transform_2, window_bounds = array<i64: 128, 128>}, {pipeline_mode = #tpu.pipeline_mode<synchronous>, transform_indices = @transform_3, window_bounds = array<i64: 8, 128>}, {transform_indices = @transform_4, window_bounds = array<i64: 128, 128>}]} {
    %c0 = arith.constant 0 : index
    %c0_0 = arith.constant 0 : index
    %0 = vector.load %arg1[%c0, %c0_0] : memref<128x128xbf16, #tpu.memory_space<vmem>>, vector<128x128xbf16>
    %c0_1 = arith.constant 0 : index
    %c0_2 = arith.constant 0 : index
    %1 = vector.load %arg2[%c0_1, %c0_2] : memref<128x128xbf16, #tpu.memory_space<vmem>>, vector<128x128xbf16>
    %c0_3 = arith.constant 0 : index
    %c0_4 = arith.constant 0 : index
    %2 = vector.load %arg3[%c0_3, %c0_4] : memref<128x128xbf16, #tpu.memory_space<vmem>>, vector<128x128xbf16>
    %c0_5 = arith.constant 0 : index
    %c0_6 = arith.constant 0 : index
    %3 = vector.load %arg4[%c0_5, %c0_6] : memref<8x128xf32, #tpu.memory_space<vmem>>, vector<8x128xf32>
    %4 = vector.extract_strided_slice %3 {offsets = [0, 0], sizes = [1, 128], strides = [1, 1]} : vector<8x128xf32> to vector<1x128xf32>
    %5 = vector.extract_strided_slice %3 {offsets = [1, 0], sizes = [1, 128], strides = [1, 1]} : vector<8x128xf32> to vector<1x128xf32>
    %6 = vector.extract_strided_slice %3 {offsets = [2, 0], sizes = [1, 128], strides = [1, 1]} : vector<8x128xf32> to vector<1x128xf32>
    %7 = vector.extract_strided_slice %3 {offsets = [3, 0], sizes = [1, 128], strides = [1, 1]} : vector<8x128xf32> to vector<1x128xf32>
    %8 = vector.extract_strided_slice %3 {offsets = [4, 0], sizes = [1, 128], strides = [1, 1]} : vector<8x128xf32> to vector<1x128xf32>
    %cst = arith.constant dense<0.000000e+00> : vector<128x128xf32>
    %9 = tpu.matmul %0, %1, %cst {dimension_numbers = #tpu.dot_dimension_numbers<[1], [0], [0], [1], [0, 0, 1, 1], [], []>} : vector<128x128xbf16>, vector<128x128xbf16>, vector<128x128xf32> -> vector<128x128xf32>
    %10 = vector.broadcast %4 : vector<1x128xf32> to vector<128x128xf32>
    %11 = arith.addf %9, %10 : vector<128x128xf32>
    %cst_7 = arith.constant 5.000000e-01 : f32
    %12 = vector.broadcast %cst_7 : f32 to vector<128x128xf32>
    %13 = arith.mulf %11, %12 : vector<128x128xf32>
    %cst_8 = arith.constant 0.707106769 : f32
    %14 = vector.broadcast %cst_8 : f32 to vector<128x128xf32>
    %15 = arith.mulf %11, %14 : vector<128x128xf32>
    %16 = math.erf %15 : vector<128x128xf32>
    %cst_9 = arith.constant 1.000000e+00 : f32
    %17 = vector.broadcast %cst_9 : f32 to vector<128x128xf32>
    %18 = arith.addf %17, %16 : vector<128x128xf32>
    %19 = arith.mulf %13, %18 : vector<128x128xf32>
    %cst_10 = arith.constant dense<0.000000e+00> : vector<128xf32>
    %20 = vector.multi_reduction <add>, %19, %cst_10 [1] : vector<128x128xf32> to vector<128xf32>
    %21 = vector.shape_cast %20 : vector<128xf32> to vector<128x1xf32>
    %cst_11 = arith.constant 3.125000e-02 : f32
    %22 = vector.broadcast %cst_11 : f32 to vector<128x1xf32>
    %23 = arith.mulf %21, %22 : vector<128x1xf32>
    %24 = vector.broadcast %23 : vector<128x1xf32> to vector<128x128xf32>
    %25 = arith.subf %19, %24 : vector<128x128xf32>
    %26 = vector.broadcast %8 : vector<1x128xf32> to vector<128x128xf32>
    %27 = arith.mulf %25, %26 : vector<128x128xf32>
    %28 = arith.mulf %27, %27 : vector<128x128xf32>
    %cst_12 = arith.constant dense<0.000000e+00> : vector<128xf32>
    %29 = vector.multi_reduction <add>, %28, %cst_12 [1] : vector<128x128xf32> to vector<128xf32>
    %30 = vector.shape_cast %29 : vector<128xf32> to vector<128x1xf32>
    %cst_13 = arith.constant 3.125000e-02 : f32
    %31 = vector.broadcast %cst_13 : f32 to vector<128x1xf32>
    %32 = arith.mulf %30, %31 : vector<128x1xf32>
    %cst_14 = arith.constant 9.99999974E-6 : f32
    %33 = vector.broadcast %cst_14 : f32 to vector<128x1xf32>
    %34 = arith.addf %32, %33 : vector<128x1xf32>
    %35 = math.rsqrt %34 : vector<128x1xf32>
    %36 = vector.broadcast %35 : vector<128x1xf32> to vector<128x128xf32>
    %37 = arith.mulf %27, %36 : vector<128x128xf32>
    %38 = vector.broadcast %5 : vector<1x128xf32> to vector<128x128xf32>
    %39 = arith.mulf %37, %38 : vector<128x128xf32>
    %40 = vector.broadcast %6 : vector<1x128xf32> to vector<128x128xf32>
    %41 = arith.addf %39, %40 : vector<128x128xf32>
    %42 = arith.truncf %41 : vector<128x128xf32> to vector<128x128xbf16>
    %cst_15 = arith.constant dense<0.000000e+00> : vector<128x128xf32>
    %43 = tpu.matmul %42, %2, %cst_15 {dimension_numbers = #tpu.dot_dimension_numbers<[1], [0], [0], [1], [0, 0, 1, 1], [], []>} : vector<128x128xbf16>, vector<128x128xbf16>, vector<128x128xf32> -> vector<128x128xf32>
    %44 = vector.broadcast %7 : vector<1x128xf32> to vector<128x128xf32>
    %45 = arith.addf %43, %44 : vector<128x128xf32>
    %46 = arith.truncf %45 : vector<128x128xf32> to vector<128x128xbf16>
    %c0_16 = arith.constant 0 : index
    %c0_17 = arith.constant 0 : index
    %47 = vector.load %arg5[%c0_16, %c0_17] : memref<128x128xbf16, #tpu.memory_space<vmem>>, vector<128x128xbf16>
    tpu.vector_store %arg5[%c0_16, %c0_17], %46 {strides = array<i32>} : memref<128x128xbf16, #tpu.memory_space<vmem>>, vector<128x128xbf16>,
    return
  }
  func.func @transform_0(%arg0: i32) -> (i32, i32) {
    %c0_i32 = arith.constant 0 : i32
    %c0_i32_0 = arith.constant 0 : i32
    return %arg0, %c0_i32 : i32, i32
  }
  func.func @transform_1(%arg0: i32) -> (i32, i32) {
    %c0_i32 = arith.constant 0 : i32
    %c0_i32_0 = arith.constant 0 : i32
    %c0_i32_1 = arith.constant 0 : i32
    return %c0_i32, %c0_i32_0 : i32, i32
  }
  func.func @transform_2(%arg0: i32) -> (i32, i32) {
    %c0_i32 = arith.constant 0 : i32
    %c0_i32_0 = arith.constant 0 : i32
    %c0_i32_1 = arith.constant 0 : i32
    return %c0_i32, %c0_i32_0 : i32, i32
  }
  func.func @transform_3(%arg0: i32) -> (i32, i32) {
    %c0_i32 = arith.constant 0 : i32
    %c0_i32_0 = arith.constant 0 : i32
    %c0_i32_1 = arith.constant 0 : i32
    return %c0_i32, %c0_i32_0 : i32, i32
  }
  func.func @transform_4(%arg0: i32) -> (i32, i32) {
    %c0_i32 = arith.constant 0 : i32
    %c0_i32_0 = arith.constant 0 : i32
    return %arg0, %c0_i32 : i32, i32
  }
}

</mosaic_0001>

<llo_original>
// kernel: tpu_custom_call.1
$region0: #{tpu_custom_call.1}
  #allocation0 [shape = 'u32[]', space=smem, size = 0x4, offset = 0x4, fixed_abs, tag = 'smem constant byte address 0x4 - core index']
  #allocation1 [shape = 'u32[144,128]{1,0:T(1,128)}', space=vmem, size = 0x12000, scoped, tag = 'internal scratch']
  %s0 = inlined_call_operand.hbm [shape: bf16[256,128], index: 0, kind: input, shape index: {}]
  %s1 = inlined_call_operand.hbm [shape: bf16[128,128], index: 1, kind: input, shape index: {}]
  %s2 = inlined_call_operand.hbm [shape: bf16[128,128], index: 2, kind: input, shape index: {}]
  %s3 = inlined_call_operand.vmem [shape: f32[8,128], index: 3, kind: input, shape index: {}]
  %s4 = inlined_call_operand.hbm [shape: bf16[256,128], index: 4, kind: output, shape index: {}]
  %s5 = sld [smem:[#allocation0]]
  $region61: #{tpu_custom_call.1} parent=0
    _
  %s7 = ssub.s32 1, %s5
  %s8 = scalar_select 0, %s7, %s5
  $region1: #{tpu_custom_call.1} parent=0
    #allocation2 [shape = 'u8[65536]{0}', space=vmem, size = 0x10000, scoped, tag = 'input window, operand 0']
    #allocation3 [shape = 's32[2]{0}', space=sflag, size = 0x8, scoped, tag = 'scoped memory for tpu_custom_call.1']
    #allocation4 [shape = 's32[2]{0}', space=sflag, size = 0x8, scoped, tag = 'scoped memory for tpu_custom_call.1']
    #allocation5 [shape = 'u8[32768]{0}', space=vmem, size = 0x8000, scoped, tag = 'input window, operand 1, single buffered']
    #allocation6 [shape = 's32[1]{0}', space=sflag, size = 0x4, scoped, tag = 'scoped memory for tpu_custom_call.1']
    #allocation7 [shape = 'u8[32768]{0}', space=vmem, size = 0x8000, scoped, tag = 'input window, operand 2, single buffered']
    #allocation8 [shape = 'u8[65536]{0}', space=vmem, size = 0x10000, scoped, tag = 'output window, operand 0']
    %9 = vsyncpa [#allocation3], 0
    %s10 = scalar_lea.sflag [#allocation3], 1
    %11 = vsyncpa %s10, 0
    %12 = vsyncpa [#allocation6], 0
    %13 = vsyncpa [#allocation4], 0
    %s14 = scalar_lea.sflag [#allocation4], 1
    %15 = vsyncpa %s14, 0
    loop: start=0, step=1, limit=4
    $region2: #{tpu_custom_call.1} parent=1 // loop_pre_header
      _
    $region3: #{tpu_custom_call.1} parent=1 // loop_header
      %s17 = sphi 0, %s21
      %p18 = scmp.ge.s32.totalorder %s17, 4
      %s27 = sphi 0, %s29
      %s30 = sphi 0, %s27
      %s31 = sphi 0, %s30
      %s47 = sphi 0, %s31
      %s51 = sphi 0, %s51
      %s53 = sphi 0, %s51
      %s54 = sphi 0, %s53
      %s68 = sphi 0, %s54
      %s72 = sphi 0, %s72
      %s74 = sphi 0, %s72
      %s75 = sphi 0, %s74
      %s89 = sphi 0, %s75
      %s93 = sphi 0, %s93
      %s95 = sphi 0, %s93
      %s96 = sphi 0, %s95
      %s110 = sphi 0, %s96
      %s116 = sphi 0, %s118
      %s119 = sphi 0, %s116
      %s120 = sphi 0, %s119
      %s136 = sphi 0, %s120
    $region4: #{tpu_custom_call.1} parent=1 // loop_header_branch
      %20 = sbr.rel (%p18) target = $region8
    $region5: #{tpu_custom_call.1} parent=1 // loop_body
      %s22 = ssub.s32 %s17, 1
      %s23 = ssub.s32 %s17, 2
      %s24 = sadd.s32 %s17, 1
      %s25 = ssub.s32 %s17, %s24
      %p26 = scmp.eq.s32.totalorder %s25, 0
      %s28 = sadd.s32 %s27, 1
      %s29 = scalar_select %p26, %s27, %s28
      %p32 = pneg %p26
      %p33 = scmp.eq.s32.totalorder %s17, 1
      %p34 = por %p32, %p33
      %p35 = scmp.ne.s32.totalorder %s27, %s30
      %p36 = scmp.eq.s32.totalorder %s17, 0
      %p37 = por %p35, %p36
      %p38 = scmp.ne.s32.totalorder %s27, %s30
      %p39 = scmp.eq.s32.totalorder %s22, 1
      %p40 = por %p38, %p39
      %p41 = scmp.ne.s32.totalorder %s30, %s31
      %p42 = scmp.eq.s32.totalorder %s22, 0
      %p43 = por %p41, %p42
      %p44 = scmp.ne.s32.totalorder %s30, %s31
      %p45 = scmp.eq.s32.totalorder %s23, 1
      %p46 = por %p44, %p45
      %p48 = scmp.ne.s32.totalorder %s31, %s47
      %p49 = scmp.eq.s32.totalorder %s23, 0
      %p50 = por %p48, %p49
      %s52 = sadd.s32 %s51, 1
      %p55 = scmp.eq.s32.totalorder %s17, 1
      %p56 = scmp.ne.s32.totalorder %s51, %s53
      %p57 = scmp.eq.s32.totalorder %s17, 0
      %p58 = por %p56, %p57
      %p59 = scmp.ne.s32.totalorder %s51, %s53
      %p60 = scmp.eq.s32.totalorder %s22, 1
      %p61 = por %p59, %p60
      %p62 = scmp.ne.s32.totalorder %s53, %s54
      %p63 = scmp.eq.s32.totalorder %s22, 0
      %p64 = por %p62, %p63
      %p65 = scmp.ne.s32.totalorder %s53, %s54
      %p66 = scmp.eq.s32.totalorder %s23, 1
      %p67 = por %p65, %p66
      %p69 = scmp.ne.s32.totalorder %s54, %s68
      %p70 = scmp.eq.s32.totalorder %s23, 0
      %p71 = por %p69, %p70
      %s73 = sadd.s32 %s72, 1
      %p76 = scmp.eq.s32.totalorder %s17, 1
      %p77 = scmp.ne.s32.totalorder %s72, %s74
      %p78 = scmp.eq.s32.totalorder %s17, 0
      %p79 = por %p77, %p78
      %p80 = scmp.ne.s32.totalorder %s72, %s74
      %p81 = scmp.eq.s32.totalorder %s22, 1
      %p82 = por %p80, %p81
      %p83 = scmp.ne.s32.totalorder %s74, %s75
      %p84 = scmp.eq.s32.totalorder %s22, 0
      %p85 = por %p83, %p84
      %p86 = scmp.ne.s32.totalorder %s74, %s75
      %p87 = scmp.eq.s32.totalorder %s23, 1
      %p88 = por %p86, %p87
      %p90 = scmp.ne.s32.totalorder %s75, %s89
      %p91 = scmp.eq.s32.totalorder %s23, 0
      %p92 = por %p90, %p91
      %s94 = sadd.s32 %s93, 1
      %p97 = scmp.eq.s32.totalorder %s17, 1
      %p98 = scmp.ne.s32.totalorder %s93, %s95
      %p99 = scmp.eq.s32.totalorder %s17, 0
      %p100 = por %p98, %p99
      %p101 = scmp.ne.s32.totalorder %s93, %s95
      %p102 = scmp.eq.s32.totalorder %s22, 1
      %p103 = por %p101, %p102
      %p104 = scmp.ne.s32.totalorder %s95, %s96
      %p105 = scmp.eq.s32.totalorder %s22, 0
      %p106 = por %p104, %p105
      %p107 = scmp.ne.s32.totalorder %s95, %s96
      %p108 = scmp.eq.s32.totalorder %s23, 1
      %p109 = por %p107, %p108
      %p111 = scmp.ne.s32.totalorder %s96, %s110
      %p112 = scmp.eq.s32.totalorder %s23, 0
      %p113 = por %p111, %p112
      %s114 = ssub.s32 %s17, %s24
      %p115 = scmp.eq.s32.totalorder %s114, 0
      %s117 = sadd.s32 %s116, 1
      %s118 = scalar_select %p115, %s116, %s117
      %p121 = pneg %p115
      %p122 = scmp.eq.s32.totalorder %s17, 1
      %p123 = por %p121, %p122
      %p124 = scmp.ne.s32.totalorder %s116, %s119
      %p125 = scmp.eq.s32.totalorder %s17, 0
      %p126 = por %p124, %p125
      %p127 = scmp.ne.s32.totalorder %s116, %s119
      %p128 = scmp.eq.s32.totalorder %s22, 1
      %p129 = por %p127, %p128
      %p130 = scmp.ne.s32.totalorder %s119, %s120
      %p131 = scmp.eq.s32.totalorder %s22, 0
      %p132 = por %p130, %p131
      %p133 = scmp.ne.s32.totalorder %s119, %s120
      %p134 = scmp.eq.s32.totalorder %s23, 1
      %p135 = por %p133, %p134
      %p137 = scmp.ne.s32.totalorder %s120, %s136
      %p138 = scmp.eq.s32.totalorder %s23, 0
      %p139 = por %p137, %p138
      %p140 = scmp.le.s32.totalorder 1, %s17
      %p141 = scmp.lt.s32.totalorder %s17, 3
      %p142 = pnand %p140, %p141
      %p143 = pneg %p142
      // Predicated region
      $region9: #{tpu_custom_call.1} parent=5 // pred_check
        _
      $region10: #{tpu_custom_call.1} parent=5 // pred_check_branch
        %145 = sbr.rel (%p142) target = $region12
      $region11: #{tpu_custom_call.1} parent=5 // pred_region
        %s146 = ssub.s32 %s17, 1
        // Predicated region
        $region13: #{tpu_custom_call.1} parent=11 // pred_check
          %p147 = pneg %p64
        $region14: #{tpu_custom_call.1} parent=11 // pred_check_branch
          %149 = sbr.rel (%p147) target = $region16
        $region15: #{tpu_custom_call.1} parent=11 // pred_region
          %s151 = ssub.s32 1024, 1024
          %152 = vsyncadd [#allocation6], %s151
          %s153 = sshll.u32 [#allocation5], 4
          %s154 = int_to_ptr.vmem [resolvable:$true] %s153
          %159 = dma.hbm_to_vmem [thread:$0]  %s1, 1024, %s154, [#allocation6], 64, 64, 4
        $region16: #{tpu_custom_call.1} parent=11 // pred_fallthru
          _
        // Predicated region
        $region17: #{tpu_custom_call.1} parent=11 // pred_check
          %p160 = pneg %p85
        $region18: #{tpu_custom_call.1} parent=11 // pred_check_branch
          %162 = sbr.rel (%p160) target = $region20
        $region19: #{tpu_custom_call.1} parent=11 // pred_region
          %s164 = ssub.s32 1024, 1024
          %165 = vsyncadd [#allocation6], %s164
          %s166 = sshll.u32 [#allocation7], 4
          %s167 = int_to_ptr.vmem [resolvable:$true] %s166
          %172 = dma.hbm_to_vmem [thread:$0]  %s2, 1024, %s167, [#allocation6], 64, 64, 4
        $region20: #{tpu_custom_call.1} parent=11 // pred_fallthru
          _
        // Predicated region
        $region21: #{tpu_custom_call.1} parent=11 // pred_check
          %p173 = pneg %p106
        $region22: #{tpu_custom_call.1} parent=11 // pred_check_branch
          %175 = sbr.rel (%p173) target = $region24
        $region23: #{tpu_custom_call.1} parent=11 // pred_region
          _
        $region24: #{tpu_custom_call.1} parent=11 // pred_fallthru
          _
      $region12: #{tpu_custom_call.1} parent=5 // pred_fallthru
        _
      %p176 = scmp.lt.s32.totalorder %s17, 2
      // Predicated region
      $region25: #{tpu_custom_call.1} parent=5 // pred_check
        %p177 = pneg %p176
      $region26: #{tpu_custom_call.1} parent=5 // pred_check_branch
        %179 = sbr.rel (%p177) target = $region28
      $region27: #{tpu_custom_call.1} parent=5 // pred_region
        // Predicated region
        $region29: #{tpu_custom_call.1} parent=27 // pred_check
          %p180 = pneg %p37
        $region30: #{tpu_custom_call.1} parent=27 // pred_check_branch
          %182 = sbr.rel (%p180) target = $region32
        $region31: #{tpu_custom_call.1} parent=27 // pred_region
          %s183 = sand.u32 %s27, 1
          %s184 = scalar_lea.sflag [#allocation3], %s183
          %s185 = sand.u32 %s27, 1
          %s186 = smul.addr %s185, 64
          %s187 = scalar_lea.vmem [#allocation2], %s186
          %s188 = smul.u32 16, %s17
          %s190 = ssub.s32 1024, 1024
          %191 = vsyncadd %s184, %s190
          %s192 = smul.addr %s188, 64
          %s193 = scalar_lea.hbm %s0, %s192
          %s194 = sshll.u32 %s187, 4
          %s195 = int_to_ptr.vmem [resolvable:$true] %s194
          %200 = dma.hbm_to_vmem [thread:$0]  %s193, 1024, %s195, %s184, 64, 64, 4
        $region32: #{tpu_custom_call.1} parent=27 // pred_fallthru
          _
      $region28: #{tpu_custom_call.1} parent=5 // pred_fallthru
        _
      %p201 = scmp.le.s32.totalorder 1, %s17
      %p202 = scmp.lt.s32.totalorder %s17, 3
      %p203 = pnand %p201, %p202
      %p204 = pneg %p203
      // Predicated region
      $region33: #{tpu_custom_call.1} parent=5 // pred_check
        _
      $region34: #{tpu_custom_call.1} parent=5 // pred_check_branch
        %206 = sbr.rel (%p203) target = $region36
      $region35: #{tpu_custom_call.1} parent=5 // pred_region
        %s207 = ssub.s32 %s17, 1
        %s208 = sand.u32 %s30, 1
        %s209 = scalar_lea.sflag [#allocation3], %s208
        %s210 = sand.u32 %s30, 1
        %s211 = smul.addr %s210, 64
        %s212 = scalar_lea.vmem [#allocation2], %s211
        // Predicated region
        $region37: #{tpu_custom_call.1} parent=35 // pred_check
          %p213 = pneg %p43
        $region38: #{tpu_custom_call.1} parent=35 // pred_check_branch
          %215 = sbr.rel (%p213) target = $region40
        $region39: #{tpu_custom_call.1} parent=35 // pred_region
          %216 = dma.done %s209, 1024
        $region40: #{tpu_custom_call.1} parent=35 // pred_fallthru
          _
        // Predicated region
        $region41: #{tpu_custom_call.1} parent=35 // pred_check
          %p217 = pneg %p64
        $region42: #{tpu_custom_call.1} parent=35 // pred_check_branch
          %219 = sbr.rel (%p217) target = $region44
        $region43: #{tpu_custom_call.1} parent=35 // pred_region
          %220 = dma.done [#allocation6], 1024
        $region44: #{tpu_custom_call.1} parent=35 // pred_fallthru
          _
        // Predicated region
        $region45: #{tpu_custom_call.1} parent=35 // pred_check
          %p221 = pneg %p85
        $region46: #{tpu_custom_call.1} parent=35 // pred_check_branch
          %223 = sbr.rel (%p221) target = $region48
        $region47: #{tpu_custom_call.1} parent=35 // pred_region
          %224 = dma.done [#allocation6], 1024
        $region48: #{tpu_custom_call.1} parent=35 // pred_fallthru
          _
        %s225 = sand.u32 %s30, 1
        %s226 = scalar_lea.sflag [#allocation3], %s225
        %s227 = sand.u32 %s30, 1
        %s228 = smul.addr %s227, 64
        %s229 = scalar_lea.vmem [#allocation2], %s228
        %p230 = pneg %p43
        %p231 = pneg %p40
        %p232 = pneg %p64
        %p233 = pneg %p61
        %p234 = pneg %p85
        %p235 = pneg %p82
        %p236 = pneg %p106
        %p237 = pneg %p103
        %p238 = pneg %p132
        %p239 = pneg %p129
        %s240 = sand.u32 %s119, 1
        %s241 = scalar_lea.sflag [#allocation4], %s240
        %s242 = sand.u32 %s119, 1
        %s243 = smul.addr %s242, 64
        %s244 = scalar_lea.vmem [#allocation8], %s243
        %s245 = smul.u32 16, %s22
        %s246 = smul.u32 16, %s22
        %v248 = vld [vmem:[%s212] sm:$0xf]
        %v249 = vld [vmem:[%s212 + $0x4] sm:$0xf]
        %v250 = vld [vmem:[%s212 + $0x8] sm:$0xf]
        %v251 = vld [vmem:[%s212 + $0xc] sm:$0xf]
        %v252 = vld [vmem:[%s212 + $0x10] sm:$0xf]
        %v253 = vld [vmem:[%s212 + $0x14] sm:$0xf]
        %v254 = vld [vmem:[%s212 + $0x18] sm:$0xf]
        %v255 = vld [vmem:[%s212 + $0x1c] sm:$0xf]
        %v256 = vld [vmem:[%s212 + $0x20] sm:$0xf]
        %v257 = vld [vmem:[%s212 + $0x24] sm:$0xf]
        %v258 = vld [vmem:[%s212 + $0x28] sm:$0xf]
        %v259 = vld [vmem:[%s212 + $0x2c] sm:$0xf]
        %v260 = vld [vmem:[%s212 + $0x30] sm:$0xf]
        %v261 = vld [vmem:[%s212 + $0x34] sm:$0xf]
        %v262 = vld [vmem:[%s212 + $0x38] sm:$0xf]
        %v263 = vld [vmem:[%s212 + $0x3c] sm:$0xf]
        %v264 = vld [vmem:[#allocation5] sm:$0xf]
        %v265 = vld [vmem:[#allocation5 + $0x4] sm:$0xf]
        %v266 = vld [vmem:[#allocation5 + $0x8] sm:$0xf]
        %v267 = vld [vmem:[#allocation5 + $0xc] sm:$0xf]
        %v268 = vld [vmem:[#allocation5 + $0x10] sm:$0xf]
        %v269 = vld [vmem:[#allocation5 + $0x14] sm:$0xf]
        %v270 = vld [vmem:[#allocation5 + $0x18] sm:$0xf]
        %v271 = vld [vmem:[#allocation5 + $0x1c] sm:$0xf]
        %v272 = vld [vmem:[#allocation5 + $0x20] sm:$0xf]
        %v273 = vld [vmem:[#allocation5 + $0x24] sm:$0xf]
        %v274 = vld [vmem:[#allocation5 + $0x28] sm:$0xf]
        %v275 = vld [vmem:[#allocation5 + $0x2c] sm:$0xf]
        %v276 = vld [vmem:[#allocation5 + $0x30] sm:$0xf]
        %v277 = vld [vmem:[#allocation5 + $0x34] sm:$0xf]
        %v278 = vld [vmem:[#allocation5 + $0x38] sm:$0xf]
        %v279 = vld [vmem:[#allocation5 + $0x3c] sm:$0xf]
        %v280 = vld [vmem:[#allocation7] sm:$0xf]
        %v281 = vld [vmem:[#allocation7 + $0x4] sm:$0xf]
        %v282 = vld [vmem:[#allocation7 + $0x8] sm:$0xf]
        %v283 = vld [vmem:[#allocation7 + $0xc] sm:$0xf]
        %v284 = vld [vmem:[#allocation7 + $0x10] sm:$0xf]
        %v285 = vld [vmem:[#allocation7 + $0x14] sm:$0xf]
        %v286 = vld [vmem:[#allocation7 + $0x18] sm:$0xf]
        %v287 = vld [vmem:[#allocation7 + $0x1c] sm:$0xf]
        %v288 = vld [vmem:[#allocation7 + $0x20] sm:$0xf]
        %v289 = vld [vmem:[#allocation7 + $0x24] sm:$0xf]
        %v290 = vld [vmem:[#allocation7 + $0x28] sm:$0xf]
        %v291 = vld [vmem:[#allocation7 + $0x2c] sm:$0xf]
        %v292 = vld [vmem:[#allocation7 + $0x30] sm:$0xf]
        %v293 = vld [vmem:[#allocation7 + $0x34] sm:$0xf]
        %v294 = vld [vmem:[#allocation7 + $0x38] sm:$0xf]
        %v295 = vld [vmem:[#allocation7 + $0x3c] sm:$0xf]
        %v296 = vld [vmem:[%s3] sm:$0xff]
        %v297 = vlaneseq
        %v298 = vshrl.u32 %v297, 7
        %v299 = vsub.s32 0, %v298
        %v300 = vrot.slane %v296, %v299
        %v317 = vunpack.c.l.b16 %v248
        %v318 = vunpack.c.l.b16 %v249
        %v319 = vunpack.c.l.b16 %v250
        %v320 = vunpack.c.l.b16 %v251
        %v321 = vunpack.c.l.b16 %v252
        %v322 = vunpack.c.l.b16 %v253
        %v323 = vunpack.c.l.b16 %v254
        %v324 = vunpack.c.l.b16 %v255
        %v325 = vunpack.c.l.b16 %v256
        %v326 = vunpack.c.l.b16 %v257
        %v327 = vunpack.c.l.b16 %v258
        %v328 = vunpack.c.l.b16 %v259
        %v329 = vunpack.c.l.b16 %v260
        %v330 = vunpack.c.l.b16 %v261
        %v331 = vunpack.c.l.b16 %v262
        %v332 = vunpack.c.l.b16 %v263
        %v333 = vpack.c.b16 %v318, %v317
        %v334 = vpack.c.b16 %v320, %v319
        %v335 = vpack.c.b16 %v322, %v321
        %v336 = vpack.c.b16 %v324, %v323
        %v337 = vpack.c.b16 %v326, %v325
        %v338 = vpack.c.b16 %v328, %v327
        %v339 = vpack.c.b16 %v330, %v329
        %v340 = vpack.c.b16 %v332, %v331
        %v365 = vunpack.c.l.b16 %v264
        %v366 = vunpack.c.l.b16 %v265
        %v367 = vunpack.c.l.b16 %v266
        %v368 = vunpack.c.l.b16 %v267
        %v369 = vunpack.c.l.b16 %v268
        %v370 = vunpack.c.l.b16 %v269
        %v371 = vunpack.c.l.b16 %v270
        %v372 = vunpack.c.l.b16 %v271
        %v373 = vunpack.c.l.b16 %v272
        %v374 = vunpack.c.l.b16 %v273
        %v375 = vunpack.c.l.b16 %v274
        %v376 = vunpack.c.l.b16 %v275
        %v377 = vunpack.c.l.b16 %v276
        %v378 = vunpack.c.l.b16 %v277
        %v379 = vunpack.c.l.b16 %v278
        %v380 = vunpack.c.l.b16 %v279
        %v381 = vpack.c.b16 %v366, %v365
        %v382 = vpack.c.b16 %v368, %v367
        %v383 = vpack.c.b16 %v370, %v369
        %v384 = vpack.c.b16 %v372, %v371
        %v385 = vpack.c.b16 %v374, %v373
        %v386 = vpack.c.b16 %v376, %v375
        %v387 = vpack.c.b16 %v378, %v377
        %v388 = vpack.c.b16 %v380, %v379
        %397 = vmatprep.subr.bf16.mxu0 0
        %398 = vmatpush1.bf16.msra.mxu0 %v381
        %399 = vmatprep.subr.bf16.mxu0 0
        %400 = vmatpush1.bf16.msra.mxu0 %v382
        %401 = vmatprep.subr.bf16.mxu0 0
        %402 = vmatpush1.bf16.msra.mxu0 %v383
        %403 = vmatprep.subr.bf16.mxu0 0
        %404 = vmatpush1.bf16.msra.mxu0 %v384
        %405 = vmatprep.subr.bf16.mxu0 0
        %406 = vmatpush1.bf16.msra.mxu0 %v385
        %407 = vmatprep.subr.bf16.mxu0 0
        %408 = vmatpush1.bf16.msra.mxu0 %v386
        %409 = vmatprep.subr.bf16.mxu0 0
        %410 = vmatpush1.bf16.msra.mxu0 %v387
        %411 = vmatprep.subr.bf16.mxu0 0
        %412 = vmatpush1.bf16.msra.mxu0 %v388
        %413 = vmatprep.subr.bf16.mxu0 0
        %414 = vmatpush1.bf16.msra.mxu0 0
        %415 = vmatprep.subr.bf16.mxu0 0
        %416 = vmatpush1.bf16.msra.mxu0 0
        %417 = vmatprep.subr.bf16.mxu0 0
        %418 = vmatpush1.bf16.msra.mxu0 0
        %419 = vmatprep.subr.bf16.mxu0 0
        %420 = vmatpush1.bf16.msra.mxu0 0
        %421 = vmatprep.subr.bf16.mxu0 0
        %422 = vmatpush1.bf16.msra.mxu0 0
        %423 = vmatprep.subr.bf16.mxu0 0
        %424 = vmatpush1.bf16.msra.mxu0 0
        %425 = vmatprep.subr.bf16.mxu0 0
        %426 = vmatpush1.bf16.msra.mxu0 0
        %427 = vmatprep.subr.bf16.mxu0 0
        %428 = vmatpush1.bf16.msra.mxu0 0
        %429 = vmatprep.mubr.bf16.mxu0 0
        %430 = vmatmul.mubr.bf16.gmra.mrb[0].mxu0 %v333
        %v431 = vpop.f32.mrb[0].mxu0
        %v432 = vadd.f32 %v300, %v431
        %v433 = vpop.f32.mrb[0].mxu0
        %v434 = vpop.f32.mrb[0].mxu0
        %v435 = vadd.f32 %v300, %v434
        %v436 = vpop.f32.mrb[0].mxu0
        %437 = vmatprep.mubr.bf16.mxu0 0
        %438 = vmatmul.mubr.bf16.gmra.mrb[0].mxu0 %v334
        %v439 = vpop.f32.mrb[0].mxu0
        %v440 = vadd.f32 %v300, %v439
        %v441 = vpop.f32.mrb[0].mxu0
        %v442 = vpop.f32.mrb[0].mxu0
        %v443 = vadd.f32 %v300, %v442
        %v444 = vpop.f32.mrb[0].mxu0
        %445 = vmatprep.mubr.bf16.mxu0 0
        %446 = vmatmul.mubr.bf16.gmra.mrb[0].mxu0 %v335
        %v447 = vpop.f32.mrb[0].mxu0
        %v448 = vadd.f32 %v300, %v447
        %v449 = vpop.f32.mrb[0].mxu0
        %v450 = vpop.f32.mrb[0].mxu0
        %v451 = vadd.f32 %v300, %v450
        %v452 = vpop.f32.mrb[0].mxu0
        %453 = vmatprep.mubr.bf16.mxu0 0
        %454 = vmatmul.mubr.bf16.gmra.mrb[0].mxu0 %v336
        %v455 = vpop.f32.mrb[0].mxu0
        %v456 = vadd.f32 %v300, %v455
        %v457 = vpop.f32.mrb[0].mxu0
        %v458 = vpop.f32.mrb[0].mxu0
        %v459 = vadd.f32 %v300, %v458
        %v460 = vpop.f32.mrb[0].mxu0
        %461 = vmatprep.mubr.bf16.mxu0 0
        %462 = vmatmul.mubr.bf16.gmra.mrb[0].mxu0 %v337
        %v463 = vpop.f32.mrb[0].mxu0
        %v464 = vadd.f32 %v300, %v463
        %v465 = vpop.f32.mrb[0].mxu0
        %v466 = vpop.f32.mrb[0].mxu0
        %v467 = vadd.f32 %v300, %v466
        %v468 = vpop.f32.mrb[0].mxu0
        %469 = vmatprep.mubr.bf16.mxu0 0
        %470 = vmatmul.mubr.bf16.gmra.mrb[0].mxu0 %v338
        %v471 = vpop.f32.mrb[0].mxu0
        %v472 = vadd.f32 %v300, %v471
        %v473 = vpop.f32.mrb[0].mxu0
        %v474 = vpop.f32.mrb[0].mxu0
        %v475 = vadd.f32 %v300, %v474
        %v476 = vpop.f32.mrb[0].mxu0
        %477 = vmatprep.mubr.bf16.mxu0 0
        %478 = vmatmul.mubr.bf16.gmra.mrb[0].mxu0 %v339
        %v479 = vpop.f32.mrb[0].mxu0
        %v480 = vadd.f32 %v300, %v479
        %v481 = vpop.f32.mrb[0].mxu0
        %v482 = vpop.f32.mrb[0].mxu0
        %v483 = vadd.f32 %v300, %v482
        %v484 = vpop.f32.mrb[0].mxu0
        %485 = vmatprep.mubr.bf16.mxu0 0
        %486 = vmatmul.mubr.bf16.gmra.mrb[0].mxu0 %v340
        %v487 = vpop.f32.mrb[0].mxu0
        %v488 = vadd.f32 %v300, %v487
        %v489 = vpop.f32.mrb[0].mxu0
        %v490 = vpop.f32.mrb[0].mxu0
        %v491 = vadd.f32 %v300, %v490
        %v492 = vpop.f32.mrb[0].mxu0
        %493 = vdwg.mxu0
        %v494 = vmul.f32 %v432, 0.5
        %v495 = vmul.f32 %v435, 0.5
        %v496 = vmul.f32 %v440, 0.5
        %v497 = vmul.f32 %v443, 0.5
        %v498 = vmul.f32 %v448, 0.5
        %v499 = vmul.f32 %v451, 0.5
        %v500 = vmul.f32 %v456, 0.5
        %v501 = vmul.f32 %v459, 0.5
        %v502 = vmul.f32 %v464, 0.5
        %v503 = vmul.f32 %v467, 0.5
        %v504 = vmul.f32 %v472, 0.5
        %v505 = vmul.f32 %v475, 0.5
        %v506 = vmul.f32 %v480, 0.5
        %v507 = vmul.f32 %v483, 0.5
        %v508 = vmul.f32 %v488, 0.5
        %v509 = vmul.f32 %v491, 0.5
        %v510 = vmul.f32 %v432, 0.70710677
        %v511 = vmul.f32 %v435, 0.70710677
        %v512 = vmul.f32 %v440, 0.70710677
        %v513 = vmul.f32 %v443, 0.70710677
        %v514 = vmul.f32 %v448, 0.70710677
        %v515 = vmul.f32 %v451, 0.70710677
        %v516 = vmul.f32 %v456, 0.70710677
        %v517 = vmul.f32 %v459, 0.70710677
        %v518 = vmul.f32 %v464, 0.70710677
        %v519 = vmul.f32 %v467, 0.70710677
        %v520 = vmul.f32 %v472, 0.70710677
        %v521 = vmul.f32 %v475, 0.70710677
        %v522 = vmul.f32 %v480, 0.70710677
        %v523 = vmul.f32 %v483, 0.70710677
        %v524 = vmul.f32 %v488, 0.70710677
        %v525 = vmul.f32 %v491, 0.70710677
        %v526 = verf.f32.pop %v510
        %v527 = verf.f32.pop %v511
        %v528 = verf.f32.pop %v512
        %v529 = verf.f32.pop %v513
        %v530 = verf.f32.pop %v514
        %v531 = verf.f32.pop %v515
        %v532 = verf.f32.pop %v516
        %v533 = verf.f32.pop %v517
        %v534 = verf.f32.pop %v518
        %v535 = verf.f32.pop %v519
        %v536 = verf.f32.pop %v520
        %v537 = verf.f32.pop %v521
        %v538 = verf.f32.pop %v522
        %v539 = verf.f32.pop %v523
        %v540 = verf.f32.pop %v524
        %v541 = verf.f32.pop %v525
        %v542 = vadd.f32 %v526, 1.0
        %v543 = vadd.f32 %v527, 1.0
        %v544 = vadd.f32 %v528, 1.0
        %v545 = vadd.f32 %v529, 1.0
        %v546 = vadd.f32 %v530, 1.0
        %v547 = vadd.f32 %v531, 1.0
        %v548 = vadd.f32 %v532, 1.0
        %v549 = vadd.f32 %v533, 1.0
        %v550 = vadd.f32 %v534, 1.0
        %v551 = vadd.f32 %v535, 1.0
        %v552 = vadd.f32 %v536, 1.0
        %v553 = vadd.f32 %v537, 1.0
        %v554 = vadd.f32 %v538, 1.0
        %v555 = vadd.f32 %v539, 1.0
        %v556 = vadd.f32 %v540, 1.0
        %v557 = vadd.f32 %v541, 1.0
        %v558 = vmul.f32 %v494, %v542
        %v559 = vmul.f32 %v495, %v543
        %v560 = vmul.f32 %v496, %v544
        %v561 = vmul.f32 %v497, %v545
        %v562 = vmul.f32 %v498, %v546
        %v563 = vmul.f32 %v499, %v547
        %v564 = vmul.f32 %v500, %v548
        %v565 = vmul.f32 %v501, %v549
        %v566 = vmul.f32 %v502, %v550
        %v567 = vmul.f32 %v503, %v551
        %v568 = vmul.f32 %v504, %v552
        %v569 = vmul.f32 %v505, %v553
        %v570 = vmul.f32 %v506, %v554
        %v571 = vmul.f32 %v507, %v555
        %v572 = vmul.f32 %v508, %v556
        %v573 = vmul.f32 %v509, %v557
        %574 = vadd.xlane.f32.xlu0 %v558
        %v575 = vpop.xlane.xlu0 %574
        %576 = vadd.xlane.f32.xlu0 %v559
        %v577 = vpop.xlane.xlu0 %576
        %578 = vadd.xlane.f32.xlu0 %v560
        %v579 = vpop.xlane.xlu0 %578
        %580 = vadd.xlane.f32.xlu0 %v561
        %v581 = vpop.xlane.xlu0 %580
        %582 = vadd.xlane.f32.xlu0 %v562
        %v583 = vpop.xlane.xlu0 %582
        %584 = vadd.xlane.f32.xlu0 %v563
        %v585 = vpop.xlane.xlu0 %584
        %586 = vadd.xlane.f32.xlu0 %v564
        %v587 = vpop.xlane.xlu0 %586
        %588 = vadd.xlane.f32.xlu0 %v565
        %v589 = vpop.xlane.xlu0 %588
        %590 = vadd.xlane.f32.xlu0 %v566
        %v591 = vpop.xlane.xlu0 %590
        %592 = vadd.xlane.f32.xlu0 %v567
        %v593 = vpop.xlane.xlu0 %592
        %594 = vadd.xlane.f32.xlu0 %v568
        %v595 = vpop.xlane.xlu0 %594
        %596 = vadd.xlane.f32.xlu0 %v569
        %v597 = vpop.xlane.xlu0 %596
        %598 = vadd.xlane.f32.xlu0 %v570
        %v599 = vpop.xlane.xlu0 %598
        %600 = vadd.xlane.f32.xlu0 %v571
        %v601 = vpop.xlane.xlu0 %600
        %602 = vadd.xlane.f32.xlu0 %v572
        %v603 = vpop.xlane.xlu0 %602
        %604 = vadd.xlane.f32.xlu0 %v573
        %v605 = vpop.xlane.xlu0 %604
        %v606 = vmul.f32 %v575, 0.03125
        %v607 = vmul.f32 %v577, 0.03125
        %v608 = vmul.f32 %v579, 0.03125
        %v609 = vmul.f32 %v581, 0.03125
        %v610 = vmul.f32 %v583, 0.03125
        %v611 = vmul.f32 %v585, 0.03125
        %v612 = vmul.f32 %v587, 0.03125
        %v613 = vmul.f32 %v589, 0.03125
        %v614 = vmul.f32 %v591, 0.03125
        %v615 = vmul.f32 %v593, 0.03125
        %v616 = vmul.f32 %v595, 0.03125
        %v617 = vmul.f32 %v597, 0.03125
        %v618 = vmul.f32 %v599, 0.03125
        %v619 = vmul.f32 %v601, 0.03125
        %v620 = vmul.f32 %v603, 0.03125
        %v621 = vmul.f32 %v605, 0.03125
        %v622 = vsub.f32 %v558, %v606
        %v623 = vsub.f32 %v559, %v607
        %v624 = vsub.f32 %v560, %v608
        %v625 = vsub.f32 %v561, %v609
        %v626 = vsub.f32 %v562, %v610
        %v627 = vsub.f32 %v563, %v611
        %v628 = vsub.f32 %v564, %v612
        %v629 = vsub.f32 %v565, %v613
        %v630 = vsub.f32 %v566, %v614
        %v631 = vsub.f32 %v567, %v615
        %v632 = vsub.f32 %v568, %v616
        %v633 = vsub.f32 %v569, %v617
        %v634 = vsub.f32 %v570, %v618
        %v635 = vsub.f32 %v571, %v619
        %v636 = vsub.f32 %v572, %v620
        %v637 = vsub.f32 %v573, %v621
        %v638 = vlaneseq
        %v639 = vshrl.u32 %v638, 7
        %v640 = vsub.s32 4, %v639
        %v641 = vrot.slane %v296, %v640
        %v642 = vmul.f32 %v622, %v641
        %v643 = vmul.f32 %v623, %v641
        %v644 = vmul.f32 %v624, %v641
        %v645 = vmul.f32 %v625, %v641
        %v646 = vmul.f32 %v626, %v641
        %v647 = vmul.f32 %v627, %v641
        %v648 = vmul.f32 %v628, %v641
        %v649 = vmul.f32 %v629, %v641
        %v650 = vmul.f32 %v630, %v641
        %v651 = vmul.f32 %v631, %v641
        %v652 = vmul.f32 %v632, %v641
        %v653 = vmul.f32 %v633, %v641
        %v654 = vmul.f32 %v634, %v641
        %v655 = vmul.f32 %v635, %v641
        %v656 = vmul.f32 %v636, %v641
        %v657 = vmul.f32 %v637, %v641
        %v658 = vmul.f32 %v642, %v642
        %v659 = vmul.f32 %v643, %v643
        %v660 = vmul.f32 %v644, %v644
        %v661 = vmul.f32 %v645, %v645
        %v662 = vmul.f32 %v646, %v646
        %v663 = vmul.f32 %v647, %v647
        %v664 = vmul.f32 %v648, %v648
        %v665 = vmul.f32 %v649, %v649
        %v666 = vmul.f32 %v650, %v650
        %v667 = vmul.f32 %v651, %v651
        %v668 = vmul.f32 %v652, %v652
        %v669 = vmul.f32 %v653, %v653
        %v670 = vmul.f32 %v654, %v654
        %v671 = vmul.f32 %v655, %v655
        %v672 = vmul.f32 %v656, %v656
        %v673 = vmul.f32 %v657, %v657
        %674 = vadd.xlane.f32.xlu0 %v658
        %v675 = vpop.xlane.xlu0 %674
        %676 = vadd.xlane.f32.xlu0 %v659
        %v677 = vpop.xlane.xlu0 %676
        %678 = vadd.xlane.f32.xlu0 %v660
        %v679 = vpop.xlane.xlu0 %678
        %680 = vadd.xlane.f32.xlu0 %v661
        %v681 = vpop.xlane.xlu0 %680
        %682 = vadd.xlane.f32.xlu0 %v662
        %v683 = vpop.xlane.xlu0 %682
        %684 = vadd.xlane.f32.xlu0 %v663
        %v685 = vpop.xlane.xlu0 %684
        %686 = vadd.xlane.f32.xlu0 %v664
        %v687 = vpop.xlane.xlu0 %686
        %688 = vadd.xlane.f32.xlu0 %v665
        %v689 = vpop.xlane.xlu0 %688
        %690 = vadd.xlane.f32.xlu0 %v666
        %v691 = vpop.xlane.xlu0 %690
        %692 = vadd.xlane.f32.xlu0 %v667
        %v693 = vpop.xlane.xlu0 %692
        %694 = vadd.xlane.f32.xlu0 %v668
        %v695 = vpop.xlane.xlu0 %694
        %696 = vadd.xlane.f32.xlu0 %v669
        %v697 = vpop.xlane.xlu0 %696
        %698 = vadd.xlane.f32.xlu0 %v670
        %v699 = vpop.xlane.xlu0 %698
        %700 = vadd.xlane.f32.xlu0 %v671
        %v701 = vpop.xlane.xlu0 %700
        %702 = vadd.xlane.f32.xlu0 %v672
        %v703 = vpop.xlane.xlu0 %702
        %704 = vadd.xlane.f32.xlu0 %v673
        %v705 = vpop.xlane.xlu0 %704
        %v706 = vmul.f32 %v675, 0.03125
        %v707 = vmul.f32 %v677, 0.03125
        %v708 = vmul.f32 %v679, 0.03125
        %v709 = vmul.f32 %v681, 0.03125
        %v710 = vmul.f32 %v683, 0.03125
        %v711 = vmul.f32 %v685, 0.03125
        %v712 = vmul.f32 %v687, 0.03125
        %v713 = vmul.f32 %v689, 0.03125
        %v714 = vmul.f32 %v691, 0.03125
        %v715 = vmul.f32 %v693, 0.03125
        %v716 = vmul.f32 %v695, 0.03125
        %v717 = vmul.f32 %v697, 0.03125
        %v718 = vmul.f32 %v699, 0.03125
        %v719 = vmul.f32 %v701, 0.03125
        %v720 = vmul.f32 %v703, 0.03125
        %v721 = vmul.f32 %v705, 0.03125
        %v722 = vadd.f32 %v706, 1e-05
        %v723 = vadd.f32 %v707, 1e-05
        %v724 = vadd.f32 %v708, 1e-05
        %v725 = vadd.f32 %v709, 1e-05
        %v726 = vadd.f32 %v710, 1e-05
        %v727 = vadd.f32 %v711, 1e-05
        %v728 = vadd.f32 %v712, 1e-05
        %v729 = vadd.f32 %v713, 1e-05
        %v730 = vadd.f32 %v714, 1e-05
        %v731 = vadd.f32 %v715, 1e-05
        %v732 = vadd.f32 %v716, 1e-05
        %v733 = vadd.f32 %v717, 1e-05
        %v734 = vadd.f32 %v718, 1e-05
        %v735 = vadd.f32 %v719, 1e-05
        %v736 = vadd.f32 %v720, 1e-05
        %v737 = vadd.f32 %v721, 1e-05
        %v738 = vrsqrt.pop %v722
        %v739 = vrsqrt.pop %v723
        %v740 = vrsqrt.pop %v724
        %v741 = vrsqrt.pop %v725
        %v742 = vrsqrt.pop %v726
        %v743 = vrsqrt.pop %v727
        %v744 = vrsqrt.pop %v728
        %v745 = vrsqrt.pop %v729
        %v746 = vrsqrt.pop %v730
        %v747 = vrsqrt.pop %v731
        %v748 = vrsqrt.pop %v732
        %v749 = vrsqrt.pop %v733
        %v750 = vrsqrt.pop %v734
        %v751 = vrsqrt.pop %v735
        %v752 = vrsqrt.pop %v736
        %v753 = vrsqrt.pop %v737
        %v754 = vmul.f32 %v642, %v738
        %v755 = vmul.f32 %v643, %v739
        %v756 = vmul.f32 %v644, %v740
        %v757 = vmul.f32 %v645, %v741
        %v758 = vmul.f32 %v646, %v742
        %v759 = vmul.f32 %v647, %v743
        %v760 = vmul.f32 %v648, %v744
        %v761 = vmul.f32 %v649, %v745
        %v762 = vmul.f32 %v650, %v746
        %v763 = vmul.f32 %v651, %v747
        %v764 = vmul.f32 %v652, %v748
        %v765 = vmul.f32 %v653, %v749
        %v766 = vmul.f32 %v654, %v750
        %v767 = vmul.f32 %v655, %v751
        %v768 = vmul.f32 %v656, %v752
        %v769 = vmul.f32 %v657, %v753
        %v770 = vlaneseq
        %v771 = vshrl.u32 %v770, 7
        %v772 = vsub.s32 1, %v771
        %v773 = vrot.slane %v296, %v772
        %v774 = vmul.f32 %v754, %v773
        %v775 = vmul.f32 %v755, %v773
        %v776 = vmul.f32 %v756, %v773
        %v777 = vmul.f32 %v757, %v773
        %v778 = vmul.f32 %v758, %v773
        %v779 = vmul.f32 %v759, %v773
        %v780 = vmul.f32 %v760, %v773
        %v781 = vmul.f32 %v761, %v773
        %v782 = vmul.f32 %v762, %v773
        %v783 = vmul.f32 %v763, %v773
        %v784 = vmul.f32 %v764, %v773
        %v785 = vmul.f32 %v765, %v773
        %v786 = vmul.f32 %v766, %v773
        %v787 = vmul.f32 %v767, %v773
        %v788 = vmul.f32 %v768, %v773
        %v789 = vmul.f32 %v769, %v773
        %v790 = vlaneseq
        %v791 = vshrl.u32 %v790, 7
        %v792 = vsub.s32 2, %v791
        %v793 = vrot.slane %v296, %v792
        %v794 = vadd.f32 %v774, %v793
        %v795 = vadd.f32 %v775, %v793
        %v796 = vadd.f32 %v776, %v793
        %v797 = vadd.f32 %v777, %v793
        %v798 = vadd.f32 %v778, %v793
        %v799 = vadd.f32 %v779, %v793
        %v800 = vadd.f32 %v780, %v793
        %v801 = vadd.f32 %v781, %v793
        %v802 = vadd.f32 %v782, %v793
        %v803 = vadd.f32 %v783, %v793
        %v804 = vadd.f32 %v784, %v793
        %v805 = vadd.f32 %v785, %v793
        %v806 = vadd.f32 %v786, %v793
        %v807 = vadd.f32 %v787, %v793
        %v808 = vadd.f32 %v788, %v793
        %v809 = vadd.f32 %v789, %v793
        %v810 = vpack.c.bf16 %v795, %v794
        %v811 = vpack.c.bf16 %v797, %v796
        %v812 = vpack.c.bf16 %v799, %v798
        %v813 = vpack.c.bf16 %v801, %v800
        %v814 = vpack.c.bf16 %v803, %v802
        %v815 = vpack.c.bf16 %v805, %v804
        %v816 = vpack.c.bf16 %v807, %v806
        %v817 = vpack.c.bf16 %v809, %v808
        %v818 = vlaneseq
        %v819 = vshrl.u32 %v818, 7
        %v820 = vsub.s32 3, %v819
        %v821 = vrot.slane %v296, %v820
        %v838 = vunpack.c.l.b16 %v280
        %v839 = vunpack.c.l.b16 %v281
        %v840 = vunpack.c.l.b16 %v282
        %v841 = vunpack.c.l.b16 %v283
        %v842 = vunpack.c.l.b16 %v284
        %v843 = vunpack.c.l.b16 %v285
        %v844 = vunpack.c.l.b16 %v286
        %v845 = vunpack.c.l.b16 %v287
        %v846 = vunpack.c.l.b16 %v288
        %v847 = vunpack.c.l.b16 %v289
        %v848 = vunpack.c.l.b16 %v290
        %v849 = vunpack.c.l.b16 %v291
        %v850 = vunpack.c.l.b16 %v292
        %v851 = vunpack.c.l.b16 %v293
        %v852 = vunpack.c.l.b16 %v294
        %v853 = vunpack.c.l.b16 %v295
        %v854 = vpack.c.b16 %v839, %v838
        %v855 = vpack.c.b16 %v841, %v840
        %v856 = vpack.c.b16 %v843, %v842
        %v857 = vpack.c.b16 %v845, %v844
        %v858 = vpack.c.b16 %v847, %v846
        %v859 = vpack.c.b16 %v849, %v848
        %v860 = vpack.c.b16 %v851, %v850
        %v861 = vpack.c.b16 %v853, %v852
        %870 = vmatprep.subr.bf16.mxu0 0
        %871 = vmatpush1.bf16.msra.mxu0 %v854
        %872 = vmatprep.subr.bf16.mxu0 0
        %873 = vmatpush1.bf16.msra.mxu0 %v855
        %874 = vmatprep.subr.bf16.mxu0 0
        %875 = vmatpush1.bf16.msra.mxu0 %v856
        %876 = vmatprep.subr.bf16.mxu0 0
        %877 = vmatpush1.bf16.msra.mxu0 %v857
        %878 = vmatprep.subr.bf16.mxu0 0
        %879 = vmatpush1.bf16.msra.mxu0 %v858
        %880 = vmatprep.subr.bf16.mxu0 0
        %881 = vmatpush1.bf16.msra.mxu0 %v859
        %882 = vmatprep.subr.bf16.mxu0 0
        %883 = vmatpush1.bf16.msra.mxu0 %v860
        %884 = vmatprep.subr.bf16.mxu0 0
        %885 = vmatpush1.bf16.msra.mxu0 %v861
        %886 = vmatprep.subr.bf16.mxu0 0
        %887 = vmatpush1.bf16.msra.mxu0 0
        %888 = vmatprep.subr.bf16.mxu0 0
        %889 = vmatpush1.bf16.msra.mxu0 0
        %890 = vmatprep.subr.bf16.mxu0 0
        %891 = vmatpush1.bf16.msra.mxu0 0
        %892 = vmatprep.subr.bf16.mxu0 0
        %893 = vmatpush1.bf16.msra.mxu0 0
        %894 = vmatprep.subr.bf16.mxu0 0
        %895 = vmatpush1.bf16.msra.mxu0 0
        %896 = vmatprep.subr.bf16.mxu0 0
        %897 = vmatpush1.bf16.msra.mxu0 0
        %898 = vmatprep.subr.bf16.mxu0 0
        %899 = vmatpush1.bf16.msra.mxu0 0
        %900 = vmatprep.subr.bf16.mxu0 0
        %901 = vmatpush1.bf16.msra.mxu0 0
        %902 = vmatprep.mubr.bf16.mxu0 0
        %903 = vmatmul.mubr.bf16.gmra.mrb[0].mxu0 %v810
        %v904 = vpop.f32.mrb[0].mxu0
        %v905 = vadd.f32 %v821, %v904
        %v906 = vpop.f32.mrb[0].mxu0
        %v907 = vpop.f32.mrb[0].mxu0
        %v908 = vadd.f32 %v821, %v907
        %v909 = vpop.f32.mrb[0].mxu0
        %910 = vmatprep.mubr.bf16.mxu0 0
        %911 = vmatmul.mubr.bf16.gmra.mrb[0].mxu0 %v811
        %v912 = vpop.f32.mrb[0].mxu0
        %v913 = vadd.f32 %v821, %v912
        %v914 = vpop.f32.mrb[0].mxu0
        %v915 = vpop.f32.mrb[0].mxu0
        %v916 = vadd.f32 %v821, %v915
        %v917 = vpop.f32.mrb[0].mxu0
        %918 = vmatprep.mubr.bf16.mxu0 0
        %919 = vmatmul.mubr.bf16.gmra.mrb[0].mxu0 %v812
        %v920 = vpop.f32.mrb[0].mxu0
        %v921 = vadd.f32 %v821, %v920
        %v922 = vpop.f32.mrb[0].mxu0
        %v923 = vpop.f32.mrb[0].mxu0
        %v924 = vadd.f32 %v821, %v923
        %v925 = vpop.f32.mrb[0].mxu0
        %926 = vmatprep.mubr.bf16.mxu0 0
        %927 = vmatmul.mubr.bf16.gmra.mrb[0].mxu0 %v813
        %v928 = vpop.f32.mrb[0].mxu0
        %v929 = vadd.f32 %v821, %v928
        %v930 = vpop.f32.mrb[0].mxu0
        %v931 = vpop.f32.mrb[0].mxu0
        %v932 = vadd.f32 %v821, %v931
        %v933 = vpop.f32.mrb[0].mxu0
        %934 = vmatprep.mubr.bf16.mxu0 0
        %935 = vmatmul.mubr.bf16.gmra.mrb[0].mxu0 %v814
        %v936 = vpop.f32.mrb[0].mxu0
        %v937 = vadd.f32 %v821, %v936
        %v938 = vpop.f32.mrb[0].mxu0
        %v939 = vpop.f32.mrb[0].mxu0
        %v940 = vadd.f32 %v821, %v939
        %v941 = vpop.f32.mrb[0].mxu0
        %942 = vmatprep.mubr.bf16.mxu0 0
        %943 = vmatmul.mubr.bf16.gmra.mrb[0].mxu0 %v815
        %v944 = vpop.f32.mrb[0].mxu0
        %v945 = vadd.f32 %v821, %v944
        %v946 = vpop.f32.mrb[0].mxu0
        %v947 = vpop.f32.mrb[0].mxu0
        %v948 = vadd.f32 %v821, %v947
        %v949 = vpop.f32.mrb[0].mxu0
        %950 = vmatprep.mubr.bf16.mxu0 0
        %951 = vmatmul.mubr.bf16.gmra.mrb[0].mxu0 %v816
        %v952 = vpop.f32.mrb[0].mxu0
        %v953 = vadd.f32 %v821, %v952
        %v954 = vpop.f32.mrb[0].mxu0
        %v955 = vpop.f32.mrb[0].mxu0
        %v956 = vadd.f32 %v821, %v955
        %v957 = vpop.f32.mrb[0].mxu0
        %958 = vmatprep.mubr.bf16.mxu0 0
        %959 = vmatmul.mubr.bf16.gmra.mrb[0].mxu0 %v817
        %v960 = vpop.f32.mrb[0].mxu0
        %v961 = vadd.f32 %v821, %v960
        %v962 = vpop.f32.mrb[0].mxu0
        %v963 = vpop.f32.mrb[0].mxu0
        %v964 = vadd.f32 %v821, %v963
        %v965 = vpop.f32.mrb[0].mxu0
        %966 = vdwg.mxu0
        %v967 = vpack.c.bf16 %v908, %v905
        %v968 = vpack.c.bf16 %v916, %v913
        %v969 = vpack.c.bf16 %v924, %v921
        %v970 = vpack.c.bf16 %v932, %v929
        %v971 = vpack.c.bf16 %v940, %v937
        %v972 = vpack.c.bf16 %v948, %v945
        %v973 = vpack.c.bf16 %v956, %v953
        %v974 = vpack.c.bf16 %v964, %v961
        %v983 = vunpack.c.l.b16 %v967
        %v984 = vunpack.c.h.b16 %v967
        %v985 = vunpack.c.l.b16 %v968
        %v986 = vunpack.c.h.b16 %v968
        %v987 = vunpack.c.l.b16 %v969
        %v988 = vunpack.c.h.b16 %v969
        %v989 = vunpack.c.l.b16 %v970
        %v990 = vunpack.c.h.b16 %v970
        %v991 = vunpack.c.l.b16 %v971
        %v992 = vunpack.c.h.b16 %v971
        %v993 = vunpack.c.l.b16 %v972
        %v994 = vunpack.c.h.b16 %v972
        %v995 = vunpack.c.l.b16 %v973
        %v996 = vunpack.c.h.b16 %v973
        %v997 = vunpack.c.l.b16 %v974
        %v998 = vunpack.c.h.b16 %v974
        %v999 = vpack.c.b16 %v983, %v983
        %v1000 = vpack.c.b16 %v984, %v984
        %v1001 = vpack.c.b16 %v985, %v985
        %v1002 = vpack.c.b16 %v986, %v986
        %v1003 = vpack.c.b16 %v987, %v987
        %v1004 = vpack.c.b16 %v988, %v988
        %v1005 = vpack.c.b16 %v989, %v989
        %v1006 = vpack.c.b16 %v990, %v990
        %v1007 = vpack.c.b16 %v991, %v991
        %v1008 = vpack.c.b16 %v992, %v992
        %v1009 = vpack.c.b16 %v993, %v993
        %v1010 = vpack.c.b16 %v994, %v994
        %v1011 = vpack.c.b16 %v995, %v995
        %v1012 = vpack.c.b16 %v996, %v996
        %v1013 = vpack.c.b16 %v997, %v997
        %v1014 = vpack.c.b16 %v998, %v998
        %1031 = vst [vmem:[%s244] sm:$0xf] %v999
        %1032 = vst [vmem:[%s244 + $0x4] sm:$0xf] %v1000
        %1033 = vst [vmem:[%s244 + $0x8] sm:$0xf] %v1001
        %1034 = vst [vmem:[%s244 + $0xc] sm:$0xf] %v1002
        %1035 = vst [vmem:[%s244 + $0x10] sm:$0xf] %v1003
        %1036 = vst [vmem:[%s244 + $0x14] sm:$0xf] %v1004
        %1037 = vst [vmem:[%s244 + $0x18] sm:$0xf] %v1005
        %1038 = vst [vmem:[%s244 + $0x1c] sm:$0xf] %v1006
        %1039 = vst [vmem:[%s244 + $0x20] sm:$0xf] %v1007
        %1040 = vst [vmem:[%s244 + $0x24] sm:$0xf] %v1008
        %1041 = vst [vmem:[%s244 + $0x28] sm:$0xf] %v1009
        %1042 = vst [vmem:[%s244 + $0x2c] sm:$0xf] %v1010
        %1043 = vst [vmem:[%s244 + $0x30] sm:$0xf] %v1011
        %1044 = vst [vmem:[%s244 + $0x34] sm:$0xf] %v1012
        %1045 = vst [vmem:[%s244 + $0x38] sm:$0xf] %v1013
        %1046 = vst [vmem:[%s244 + $0x3c] sm:$0xf] %v1014
        %s1047 = sand.u32 %s119, 1
        %s1048 = scalar_lea.sflag [#allocation4], %s1047
        %s1049 = sand.u32 %s119, 1
        %s1050 = smul.addr %s1049, 64
        %s1051 = scalar_lea.vmem [#allocation8], %s1050
        // Predicated region
        $region49: #{tpu_custom_call.1} parent=35 // pred_check
          %p1052 = pneg %p129
        $region50: #{tpu_custom_call.1} parent=35 // pred_check_branch
          %1054 = sbr.rel (%p1052) target = $region52
        $region51: #{tpu_custom_call.1} parent=35 // pred_region
          %s1055 = smul.u32 16, %s22
          %s1057 = ssub.s32 1024, 1024
          %1058 = vsyncadd %s1048, %s1057
          %s1059 = smul.addr %s1055, 64
          %s1060 = scalar_lea.hbm %s4, %s1059
          %s1061 = sshll.u32 %s1051, 4
          %s1062 = int_to_ptr.vmem [resolvable:$true] %s1061
          %1067 = dma.vmem_to_hbm [thread:$0]  %s1062, 1024, %s1060, %s1048, 64, 64, 4
        $region52: #{tpu_custom_call.1} parent=35 // pred_fallthru
          _
      $region36: #{tpu_custom_call.1} parent=5 // pred_fallthru
        _
      %p1068 = scmp.le.s32.totalorder 2, %s17
      // Predicated region
      $region53: #{tpu_custom_call.1} parent=5 // pred_check
        %p1069 = pneg %p1068
      $region54: #{tpu_custom_call.1} parent=5 // pred_check_branch
        %1071 = sbr.rel (%p1069) target = $region56
      $region55: #{tpu_custom_call.1} parent=5 // pred_region
        %s1072 = ssub.s32 %s17, 2
        // Predicated region
        $region57: #{tpu_custom_call.1} parent=55 // pred_check
          %p1073 = pneg %p135
        $region58: #{tpu_custom_call.1} parent=55 // pred_check_branch
          %1075 = sbr.rel (%p1073) target = $region60
        $region59: #{tpu_custom_call.1} parent=55 // pred_region
          %s1076 = sand.u32 %s120, 1
          %s1077 = scalar_lea.sflag [#allocation4], %s1076
          %s1078 = sand.u32 %s120, 1
          %s1079 = smul.addr %s1078, 64
          %s1080 = scalar_lea.vmem [#allocation8], %s1079
          %1081 = dma.done %s1077, 1024
        $region60: #{tpu_custom_call.1} parent=55 // pred_fallthru
          _
      $region56: #{tpu_custom_call.1} parent=5 // pred_fallthru
        _
    $region6: #{tpu_custom_call.1} parent=1 // loop_footer
      %s21 = sadd.s32 1, %s17
    $region7: #{tpu_custom_call.1} parent=1 // loop_footer_branch
      %16 = sbr.rel target = $region3
    $region8: #{tpu_custom_call.1} parent=1 // loop_exit
      _
    %1082 = vsyncpa [#allocation3], 1
    %s1083 = scalar_lea.sflag [#allocation3], 1
    %1084 = vsyncpa %s1083, 1
    %1085 = vsyncpa [#allocation6], 1
    %1086 = vsyncpa [#allocation4], 1
    %s1087 = scalar_lea.sflag [#allocation4], 1
    %1088 = vsyncpa %s1087, 1

</llo_original>
